<compile_context>
chip_gen: v5e
topology: v5e:2x2
jax: 0.10.0
libtpu: 0.0.40
codegen_flags: <defaults>
</compile_context>

<pallas_src>
import math
import functools

import jax
import jax.numpy as jnp
from jax.experimental import pallas as pl
from jax.experimental.pallas import tpu as pltpu


def eca_kernel_size(channel, gamma=2, b=1):
    ks = int(abs((math.log(channel, 2) + b) / gamma))
    return ks if ks % 2 else ks + 1


def _conv_toeplitz(weight, c):
    """(k,) Conv1d(1,1,k, pad=k//2, bias=False) weights -> banded (c, c) matrix M
    such that M @ y[:, None] == conv1d(y) for a length-c signal y (zero padded)."""
    k = weight.shape[0]
    pad = k // 2
    i = jnp.arange(c)[:, None]
    s = jnp.arange(c)[None, :]
    d = s - i + pad                                   # tap index for (out i, src s)
    return jnp.where((d >= 0) & (d < k),
                     weight[jnp.clip(d, 0, k - 1)],
                     jnp.zeros((), weight.dtype)).astype(jnp.float32)


def _pool_attn_kernel(m_ref, x_ref, attn_ref, acc_ref, *, hw, tile, mask_tail):
    """Per-channel spatial mean (accumulated over HW tiles) -> conv1d (as a small
    banded matmul) -> sigmoid.  Grid: (B, num_hw_tiles); HW axis is 'arbitrary'."""
    ti = pl.program_id(1)

    @pl.when(ti == 0)
    def _():
        acc_ref[...] = jnp.zeros_like(acc_ref)

    xf = x_ref[...].astype(jnp.float32)               # (C, T)
    if mask_tail:                                     # zero out lanes past HW (ragged tail)
        lane = jax.lax.broadcasted_iota(jnp.int32, xf.shape, 1)
        xf = jnp.where(ti * tile + lane < hw, xf, jnp.float32(0.0))
    acc_ref[...] += jnp.sum(xf, axis=1, keepdims=True)          # lane reduce -> (C, 1)

    @pl.when(ti == pl.num_programs(1) - 1)
    def _():
        mean = acc_ref[...] * jnp.float32(1.0 / hw)             # (C, 1)
        conv = jnp.dot(m_ref[...], mean,                        # banded conv as matmul
                       preferred_element_type=jnp.float32)      # (C, 1)
        attn_ref[...] = jax.nn.sigmoid(conv)


def _scale_kernel(attn_ref, x_ref, o_ref):
    """out = x * attn, streaming over lane-dense HW tiles in the native dtype."""
    o_ref[...] = x_ref[...] * attn_ref[...].astype(o_ref.dtype)


def _choose_tile(hw, c, dsize, target_bytes=2 * 1024 * 1024):
    """Largest HW tile with c*T*dsize <= ~2 MiB (near-roofline block size), as a
    multiple of 128 lanes; whole HW if it already fits."""
    if c * hw * dsize <= target_bytes:
        return hw
    t = max(128, (target_bytes // (c * dsize)) // 128 * 128)
    return int(min(t, hw))


def eca_forward(x_nchw, weight, *, tile_hw=None):
    """x_nchw: (B, C, H, W); weight: (k,) Conv1d(1,1,k, bias=False) weights."""
    b, c, h, w = x_nchw.shape
    hw = h * w
    dsize = jnp.dtype(x_nchw.dtype).itemsize

    x3 = x_nchw.reshape(b, c, hw)                     # free reshape: (B, C, HW)
    m = _conv_toeplitz(weight, c)                     # (C, C) banded conv matrix

    tile = tile_hw if tile_hw is not None else _choose_tile(hw, c, dsize)
    nt = pl.cdiv(hw, tile)
    mask_tail = (hw % tile) != 0

    vmem_limit = int(min(96 << 20,
                         max(16 << 20, 6 * c * tile * dsize + 4 * c * c + (2 << 20))))

    # Pass 1: pooled mean + conv + sigmoid  ->  attn (B, C, 1) f32.
    attn = pl.pallas_call(
        functools.partial(_pool_attn_kernel, hw=hw, tile=tile, mask_tail=mask_tail),
        out_shape=jax.ShapeDtypeStruct((b, c, 1), jnp.float32),
        grid=(b, nt),
        in_specs=[
            pl.BlockSpec((c, c), lambda bi, ti: (0, 0)),                     # conv matrix
            pl.BlockSpec((pl.Squeezed(), c, tile), lambda bi, ti: (bi, 0, ti)),
        ],
        out_specs=pl.BlockSpec((pl.Squeezed(), c, 1), lambda bi, ti: (bi, 0, 0)),
        scratch_shapes=[pltpu.VMEM((c, 1), jnp.float32)],
        compiler_params=pltpu.CompilerParams(
            dimension_semantics=("parallel", "arbitrary"),
            vmem_limit_bytes=vmem_limit),
        cost_estimate=pl.CostEstimate(
            flops=b * c * hw + 2 * b * c * c,
            transcendentals=b * c,
            bytes_accessed=b * c * hw * dsize + c * c * 4 + b * c * 4),
    )(m, x3)

    # Pass 2: lane-dense streaming scale, x * attn, both grid axes parallel.
    out3 = pl.pallas_call(
        _scale_kernel,
        out_shape=jax.ShapeDtypeStruct((b, c, hw), x_nchw.dtype),
        grid=(b, nt),
        in_specs=[
            pl.BlockSpec((pl.Squeezed(), c, 1), lambda bi, ti: (bi, 0, 0)),
            pl.BlockSpec((pl.Squeezed(), c, tile), lambda bi, ti: (bi, 0, ti)),
        ],
        out_specs=pl.BlockSpec((pl.Squeezed(), c, tile), lambda bi, ti: (bi, 0, ti)),
        compiler_params=pltpu.CompilerParams(
            dimension_semantics=("parallel", "parallel"),
            vmem_limit_bytes=vmem_limit),
        cost_estimate=pl.CostEstimate(
            flops=b * c * hw,
            transcendentals=0,
            bytes_accessed=2 * b * c * hw * dsize + b * c * 4),
    )(attn, x3)

    return out3.reshape(b, c, h, w)                   # free reshape back to NCHW


def eca_reference(x, weight):
    """Pure-JAX reference matching the PyTorch module."""
    b, c, h, w = x.shape
    k = weight.shape[0]
    pad = k // 2
    y = jnp.mean(x, axis=(2, 3))                      # (b, c)
    yp = jnp.pad(y, ((0, 0), (pad, pad)))
    conv = jnp.zeros_like(y)
    for j in range(k):
        conv = conv + weight[j] * yp[:, j:j + c]
    attn = jax.nn.sigmoid(conv)[:, :, None, None]
    return x * attn


if __name__ == "__main__":
    B, C, H, W = 2, 16, 16, 16
    k = eca_kernel_size(C)        # C=16 -> kernel_size=3, padding=1
    key = jax.random.PRNGKey(0)
    kx, kw, kx2 = jax.random.split(key, 3)

    x = jax.random.normal(kx, (B, C, H, W), dtype=jnp.float32)
    bound = 1.0 / math.sqrt(1 * k)
    weight = jax.random.uniform(kw, (k,), jnp.float32, minval=-bound, maxval=bound)

    # Single HW tile path.
    out = jax.block_until_ready(eca_forward(x, weight))
    ref = eca_reference(x, weight)
    assert out.shape == (B, C, H, W)
    assert jnp.allclose(out, ref, atol=1e-5, rtol=1e-5), "mismatch vs reference (single tile)"

    # Multi-tile path: HW = 1024 accumulated over four 256-lane tiles.
    x2 = jax.random.normal(kx2, (B, C, 32, 32), dtype=jnp.float32)
    out2 = jax.block_until_ready(eca_forward(x2, weight, tile_hw=256))
    ref2 = eca_reference(x2, weight)
    assert jnp.allclose(out2, ref2, atol=1e-5, rtol=1e-5), "mismatch vs reference (tiled)"

    print("KERNEL_OK")
</pallas_src>

<mosaic_0001>
module attributes {stable_mosaic.version = 11 : i64} {
  func.func @_pool_attn_kernel(%arg0: i32, %arg1: i32, %arg2: memref<16x16xf32, #tpu.memory_space<vmem>>, %arg3: memref<1x16x256xf32, #tpu.memory_space<vmem>>, %arg4: memref<1x16x1xf32, #tpu.memory_space<vmem>>, %arg5: memref<16x1xf32, #tpu.memory_space<vmem>>) attributes {dimension_semantics = [#tpu.dimension_semantics<parallel>, #tpu.dimension_semantics<arbitrary>], iteration_bounds = array<i64: 2, 1>, scalar_prefetch = 0 : i64, scratch_operands = 1 : i64, tpu.core_type = #tpu.core_type<tc>, window_params = [{pipeline_mode = #tpu.pipeline_mode<synchronous>, transform_indices = @transform_0, window_bounds = array<i64: 16, 16>}, {transform_indices = @transform_1, window_bounds = array<i64: 1, 16, 256>}, {transform_indices = @transform_2, window_bounds = array<i64: 1, 16, 1>}]} {
    %c0_i32 = arith.constant 0 : i32
    %0 = arith.cmpi eq, %arg1, %c0_i32 : i32
    %1 = arith.extui %0 : i1 to i32
    %c0_i32_0 = arith.constant 0 : i32
    %2 = arith.cmpi ne, %1, %c0_i32_0 : i32
    scf.if %2 {
      %cst_9 = arith.constant 0.000000e+00 : f32
      %13 = vector.broadcast %cst_9 : f32 to vector<16x1xf32>
      %c0_10 = arith.constant 0 : index
      %c0_11 = arith.constant 0 : index
      %14 = vector.load %arg5[%c0_10, %c0_11] : memref<16x1xf32, #tpu.memory_space<vmem>>, vector<16x1xf32>
      tpu.vector_store %arg5[%c0_10, %c0_11], %13 {strides = array<i32>} : memref<16x1xf32, #tpu.memory_space<vmem>>, vector<16x1xf32>,
    } else {
    }
    %c0 = arith.constant 0 : index
    %c0_1 = arith.constant 0 : index
    %c0_2 = arith.constant 0 : index
    %3 = vector.load %arg3[%c0, %c0_1, %c0_2] : memref<1x16x256xf32, #tpu.memory_space<vmem>>, vector<1x16x256xf32>
    %4 = vector.shape_cast %3 : vector<1x16x256xf32> to vector<16x256xf32>
    %c0_3 = arith.constant 0 : index
    %c0_4 = arith.constant 0 : index
    %5 = vector.load %arg5[%c0_3, %c0_4] : memref<16x1xf32, #tpu.memory_space<vmem>>, vector<16x1xf32>
    %cst = arith.constant dense<0.000000e+00> : vector<16xf32>
    %6 = vector.multi_reduction <add>, %4, %cst [1] : vector<16x256xf32> to vector<16xf32>
    %7 = vector.shape_cast %6 : vector<16xf32> to vector<16x1xf32>
    %8 = arith.addf %5, %7 : vector<16x1xf32>
    %c0_5 = arith.constant 0 : index
    %c0_6 = arith.constant 0 : index
    %9 = vector.load %arg5[%c0_5, %c0_6] : memref<16x1xf32, #tpu.memory_space<vmem>>, vector<16x1xf32>
    tpu.vector_store %arg5[%c0_5, %c0_6], %8 {strides = array<i32>} : memref<16x1xf32, #tpu.memory_space<vmem>>, vector<16x1xf32>,
    %c0_i32_7 = arith.constant 0 : i32
    %10 = arith.cmpi eq, %arg1, %c0_i32_7 : i32
    %11 = arith.extui %10 : i1 to i32
    %c0_i32_8 = arith.constant 0 : i32
    %12 = arith.cmpi ne, %11, %c0_i32_8 : i32
    scf.if %12 {
      %c0_9 = arith.constant 0 : index
      %c0_10 = arith.constant 0 : index
      %13 = vector.load %arg5[%c0_9, %c0_10] : memref<16x1xf32, #tpu.memory_space<vmem>>, vector<16x1xf32>
      %cst_11 = arith.constant 3.906250e-03 : f32
      %14 = vector.broadcast %cst_11 : f32 to vector<16x1xf32>
      %15 = arith.mulf %13, %14 : vector<16x1xf32>
      %c0_12 = arith.constant 0 : index
      %c0_13 = arith.constant 0 : index
      %16 = vector.load %arg2[%c0_12, %c0_13] : memref<16x16xf32, #tpu.memory_space<vmem>>, vector<16x16xf32>
      %cst_14 = arith.constant dense<0.000000e+00> : vector<16x1xf32>
      %17 = tpu.matmul %16, %15, %cst_14 {dimension_numbers = #tpu.dot_dimension_numbers<[1], [0], [0], [1], [0, 0, 1, 1], [], []>} : vector<16x16xf32>, vector<16x1xf32>, vector<16x1xf32> -> vector<16x1xf32>
      %18 = arith.negf %17 : vector<16x1xf32>
      %19 = math.exp %18 : vector<16x1xf32>
      %cst_15 = arith.constant 1.000000e+00 : f32
      %20 = vector.broadcast %cst_15 : f32 to vector<16x1xf32>
      %21 = arith.addf %20, %19 : vector<16x1xf32>
      %22 = arith.divf %20, %21 : vector<16x1xf32>
      %c0_16 = arith.constant 0 : index
      %c0_17 = arith.constant 0 : index
      %c0_18 = arith.constant 0 : index
      %23 = vector.load %arg4[%c0_16, %c0_17, %c0_18] : memref<1x16x1xf32, #tpu.memory_space<vmem>>, vector<1x16x1xf32>
      %24 = vector.shape_cast %23 : vector<1x16x1xf32> to vector<16x1xf32>
      %25 = vector.shape_cast %22 : vector<16x1xf32> to vector<1x16x1xf32>
      tpu.vector_store %arg4[%c0_16, %c0_17, %c0_18], %25 {strides = array<i32>} : memref<1x16x1xf32, #tpu.memory_space<vmem>>, vector<1x16x1xf32>,
    } else {
    }
    return
  }
  func.func @transform_0(%arg0: i32, %arg1: i32) -> (i32, i32) {
    %c0_i32 = arith.constant 0 : i32
    %c0_i32_0 = arith.constant 0 : i32
    %c0_i32_1 = arith.constant 0 : i32
    return %c0_i32, %c0_i32_0 : i32, i32
  }
  func.func @transform_1(%arg0: i32, %arg1: i32) -> (i32, i32, i32) {
    %c0_i32 = arith.constant 0 : i32
    %c0_i32_0 = arith.constant 0 : i32
    return %arg0, %c0_i32, %arg1 : i32, i32, i32
  }
  func.func @transform_2(%arg0: i32, %arg1: i32) -> (i32, i32, i32) {
    %c0_i32 = arith.constant 0 : i32
    %c0_i32_0 = arith.constant 0 : i32
    %c0_i32_1 = arith.constant 0 : i32
    return %arg0, %c0_i32, %c0_i32_0 : i32, i32, i32
  }
}

</mosaic_0001>

<llo_original>
// kernel: tpu_custom_call.1
$region0: #{tpu_custom_call.1}
  #allocation0 [shape = 'u32[]', space=smem, size = 0x4, offset = 0x4, fixed_abs, tag = 'smem constant byte address 0x4 - core index']
  #allocation1 [shape = 'u32[72,128]{1,0:T(1,128)}', space=vmem, size = 0x9000, scoped, tag = 'internal scratch']
  #allocation2 [shape = 'f32[16,1]{1,0:T(8,128)}', space=vmem, size = 0x2000, scoped, tag = 'scratch operand']
  %s0 = inlined_call_operand.hbm [shape: f32[16,16], index: 0, kind: input, shape index: {}]
  %s1 = inlined_call_operand.hbm [shape: f32[2,16,256], index: 1, kind: input, shape index: {}]
  %s2 = inlined_call_operand.vmem [shape: f32[2,16,1], index: 2, kind: output, shape index: {}]
  %s3 = sld [smem:[#allocation0]]
  $region57: #{tpu_custom_call.1} parent=0
    _
  %s5 = ssub.s32 1, %s3
  %s6 = scalar_select 0, %s5, %s3
  $region1: #{tpu_custom_call.1} parent=0
    #allocation3 [shape = 'u8[8192]{0}', space=vmem, size = 0x2000, scoped, tag = 'input window, operand 0, single buffered']
    #allocation4 [shape = 's32[2]{0}', space=sflag, size = 0x8, scoped, tag = 'scoped memory for tpu_custom_call.1']
    #allocation5 [shape = 'u8[32768]{0}', space=vmem, size = 0x8000, scoped, tag = 'input window, operand 1']
    #allocation6 [shape = 's32[2]{0}', space=sflag, size = 0x8, scoped, tag = 'scoped memory for tpu_custom_call.1']
    %7 = vsyncpa [#allocation4], 0
    %8 = vsyncpa [#allocation6], 0
    %s9 = scalar_lea.sflag [#allocation6], 1
    %10 = vsyncpa %s9, 0
    loop: start=0, step=1, limit=4
    $region2: #{tpu_custom_call.1} parent=1 // loop_pre_header
      _
    $region3: #{tpu_custom_call.1} parent=1 // loop_header
      %s12 = sphi 0, %s16
      %p13 = scmp.ge.s32.totalorder %s12, 4
      %s19 = sphi 0, %s31
      %s20 = sphi 0, %s27
      %s21 = sphi 0, %s19
      %s22 = sphi 0, %s20
      %s23 = sphi 0, %s21
      %s24 = sphi 0, %s22
      %s32 = sphi 0, %s32
      %s34 = sphi 0, %s32
      %s35 = sphi 0, %s34
      %s49 = sphi 0, %s35
      %s57 = sphi 0, %s59
      %s60 = sphi 0, %s57
      %s61 = sphi 0, %s60
      %s77 = sphi 0, %s61
      %s83 = sphi 0, %s85
      %s86 = sphi 0, %s83
      %s87 = sphi 0, %s86
      %s103 = sphi 0, %s87
    $region4: #{tpu_custom_call.1} parent=1 // loop_header_branch
      %15 = sbr.rel (%p13) target = $region8
    $region5: #{tpu_custom_call.1} parent=1 // loop_body
      %s17 = ssub.s32 %s12, 1
      %s18 = ssub.s32 %s12, 2
      %s25 = sadd.s32 1, %s20
      %p26 = scmp.ge.s32.totalorder %s25, 1
      %s27 = scalar_select %p26, 0, %s25
      %s28 = sadd.s32 1, %s19
      %s29 = scalar_select %p26, %s28, %s19
      %p30 = scmp.ge.s32.totalorder %s29, 2
      %s31 = scalar_select %p30, 0, %s29
      %s33 = sadd.s32 %s32, 1
      %p36 = scmp.eq.s32.totalorder %s12, 1
      %p37 = scmp.ne.s32.totalorder %s32, %s34
      %p38 = scmp.eq.s32.totalorder %s12, 0
      %p39 = por %p37, %p38
      %p40 = scmp.ne.s32.totalorder %s32, %s34
      %p41 = scmp.eq.s32.totalorder %s17, 1
      %p42 = por %p40, %p41
      %p43 = scmp.ne.s32.totalorder %s34, %s35
      %p44 = scmp.eq.s32.totalorder %s17, 0
      %p45 = por %p43, %p44
      %p46 = scmp.ne.s32.totalorder %s34, %s35
      %p47 = scmp.eq.s32.totalorder %s18, 1
      %p48 = por %p46, %p47
      %p50 = scmp.ne.s32.totalorder %s35, %s49
      %p51 = scmp.eq.s32.totalorder %s18, 0
      %p52 = por %p50, %p51
      %s53 = ssub.s32 %s19, %s31
      %s54 = ssub.s32 %s20, %s27
      %s55 = sor.u32 %s53, %s54
      %p56 = scmp.eq.s32.totalorder %s55, 0
      %s58 = sadd.s32 %s57, 1
      %s59 = scalar_select %p56, %s57, %s58
      %p62 = pneg %p56
      %p63 = scmp.eq.s32.totalorder %s12, 1
      %p64 = por %p62, %p63
      %p65 = scmp.ne.s32.totalorder %s57, %s60
      %p66 = scmp.eq.s32.totalorder %s12, 0
      %p67 = por %p65, %p66
      %p68 = scmp.ne.s32.totalorder %s57, %s60
      %p69 = scmp.eq.s32.totalorder %s17, 1
      %p70 = por %p68, %p69
      %p71 = scmp.ne.s32.totalorder %s60, %s61
      %p72 = scmp.eq.s32.totalorder %s17, 0
      %p73 = por %p71, %p72
      %p74 = scmp.ne.s32.totalorder %s60, %s61
      %p75 = scmp.eq.s32.totalorder %s18, 1
      %p76 = por %p74, %p75
      %p78 = scmp.ne.s32.totalorder %s61, %s77
      %p79 = scmp.eq.s32.totalorder %s18, 0
      %p80 = por %p78, %p79
      %s81 = ssub.s32 %s19, %s31
      %p82 = scmp.eq.s32.totalorder %s81, 0
      %s84 = sadd.s32 %s83, 1
      %s85 = scalar_select %p82, %s83, %s84
      %p88 = pneg %p82
      %p89 = scmp.eq.s32.totalorder %s12, 1
      %p90 = por %p88, %p89
      %p91 = scmp.ne.s32.totalorder %s83, %s86
      %p92 = scmp.eq.s32.totalorder %s12, 0
      %p93 = por %p91, %p92
      %p94 = scmp.ne.s32.totalorder %s83, %s86
      %p95 = scmp.eq.s32.totalorder %s17, 1
      %p96 = por %p94, %p95
      %p97 = scmp.ne.s32.totalorder %s86, %s87
      %p98 = scmp.eq.s32.totalorder %s17, 0
      %p99 = por %p97, %p98
      %p100 = scmp.ne.s32.totalorder %s86, %s87
      %p101 = scmp.eq.s32.totalorder %s18, 1
      %p102 = por %p100, %p101
      %p104 = scmp.ne.s32.totalorder %s87, %s103
      %p105 = scmp.eq.s32.totalorder %s18, 0
      %p106 = por %p104, %p105
      %p107 = scmp.le.s32.totalorder 1, %s12
      %p108 = scmp.lt.s32.totalorder %s12, 3
      %p109 = pnand %p107, %p108
      %p110 = pneg %p109
      // Predicated region
      $region9: #{tpu_custom_call.1} parent=5 // pred_check
        _
      $region10: #{tpu_custom_call.1} parent=5 // pred_check_branch
        %112 = sbr.rel (%p109) target = $region12
      $region11: #{tpu_custom_call.1} parent=5 // pred_region
        %s113 = ssub.s32 %s12, 1
        // Predicated region
        $region13: #{tpu_custom_call.1} parent=11 // pred_check
          %p114 = pneg %p45
        $region14: #{tpu_custom_call.1} parent=11 // pred_check_branch
          %116 = sbr.rel (%p114) target = $region16
        $region15: #{tpu_custom_call.1} parent=11 // pred_region
          %118 = vsyncadd [#allocation4], 0
          %s119 = sshll.u32 %s0, 4
          %s120 = int_to_ptr.hbm [resolvable:$true] %s119
          %s121 = sshll.u32 [#allocation3], 4
          %s122 = int_to_ptr.vmem [resolvable:$true] %s121
          %127 = dma.hbm_to_vmem [thread:$0]  %s120, 256, %s122, [#allocation4], 128, 128, 8
        $region16: #{tpu_custom_call.1} parent=11 // pred_fallthru
          _
      $region12: #{tpu_custom_call.1} parent=5 // pred_fallthru
        _
      %p128 = scmp.lt.s32.totalorder %s12, 2
      // Predicated region
      $region17: #{tpu_custom_call.1} parent=5 // pred_check
        %p129 = pneg %p128
      $region18: #{tpu_custom_call.1} parent=5 // pred_check_branch
        %131 = sbr.rel (%p129) target = $region20
      $region19: #{tpu_custom_call.1} parent=5 // pred_region
        // Predicated region
        $region21: #{tpu_custom_call.1} parent=19 // pred_check
          %p132 = pneg %p67
        $region22: #{tpu_custom_call.1} parent=19 // pred_check_branch
          %134 = sbr.rel (%p132) target = $region24
        $region23: #{tpu_custom_call.1} parent=19 // pred_region
          %s135 = sand.u32 %s57, 1
          %s136 = scalar_lea.sflag [#allocation6], %s135
          %s137 = sand.u32 %s57, 1
          %s138 = smul.addr %s137, 32
          %s139 = scalar_lea.vmem [#allocation5], %s138
          %s140 = smul.u32 2, %s20
          %142 = vsyncadd %s136, 0
          %s143 = smul.addr %s19, 4
          %s144 = sadd.s32 %s140, %s143
          %s145 = smul.addr %s144, 8
          %s146 = scalar_lea.hbm %s1, %s145
          %s147 = sshll.u32 %s146, 4
          %s148 = int_to_ptr.hbm [resolvable:$true] %s147
          %s149 = sshll.u32 %s139, 4
          %s150 = int_to_ptr.vmem [resolvable:$true] %s149
          %155 = dma.hbm_to_vmem [thread:$0]  %s148, 512, %s150, %s136, 256, 256, 16
        $region24: #{tpu_custom_call.1} parent=19 // pred_fallthru
          _
      $region20: #{tpu_custom_call.1} parent=5 // pred_fallthru
        _
      %p156 = scmp.le.s32.totalorder 1, %s12
      %p157 = scmp.lt.s32.totalorder %s12, 3
      %p158 = pnand %p156, %p157
      %p159 = pneg %p158
      // Predicated region
      $region25: #{tpu_custom_call.1} parent=5 // pred_check
        _
      $region26: #{tpu_custom_call.1} parent=5 // pred_check_branch
        %161 = sbr.rel (%p158) target = $region28
      $region27: #{tpu_custom_call.1} parent=5 // pred_region
        %s162 = ssub.s32 %s12, 1
        // Predicated region
        $region29: #{tpu_custom_call.1} parent=27 // pred_check
          %p163 = pneg %p45
        $region30: #{tpu_custom_call.1} parent=27 // pred_check_branch
          %165 = sbr.rel (%p163) target = $region32
        $region31: #{tpu_custom_call.1} parent=27 // pred_region
          %167 = dma.done [#allocation4], 256
        $region32: #{tpu_custom_call.1} parent=27 // pred_fallthru
          _
        %s168 = sand.u32 %s60, 1
        %s169 = scalar_lea.sflag [#allocation6], %s168
        %s170 = sand.u32 %s60, 1
        %s171 = smul.addr %s170, 32
        %s172 = scalar_lea.vmem [#allocation5], %s171
        // Predicated region
        $region33: #{tpu_custom_call.1} parent=27 // pred_check
          %p173 = pneg %p73
        $region34: #{tpu_custom_call.1} parent=27 // pred_check_branch
          %175 = sbr.rel (%p173) target = $region36
        $region35: #{tpu_custom_call.1} parent=27 // pred_region
          %177 = dma.done %s169, 512
        $region36: #{tpu_custom_call.1} parent=27 // pred_fallthru
          _
        %p178 = pneg %p45
        %p179 = pneg %p42
        %s180 = sand.u32 %s60, 1
        %s181 = scalar_lea.sflag [#allocation6], %s180
        %s182 = sand.u32 %s60, 1
        %s183 = smul.addr %s182, 32
        %s184 = scalar_lea.vmem [#allocation5], %s183
        %p185 = pneg %p73
        %p186 = pneg %p70
        %p187 = pneg %p99
        %p188 = pneg %p96
        %p189 = scmp.lt.s32.totalorder %s21, 1
        %s190 = scalar_select %p189, %s21, 1
        %s191 = smul.addr %s190, 2
        %s192 = smul.addr %s191, 8
        %s193 = scalar_lea.vmem %s2, %s192
        %s194 = smul.u32 2, %s22
        %p195 = scmp.lt.s32.totalorder %s21, 1
        %s196 = scalar_select %p195, %s21, 1
        %s197 = smul.addr %s196, 2
        %s198 = smul.addr %s197, 8
        %s199 = scalar_lea.vmem %s2, %s198
        %p200 = scmp.eq.s32.totalorder %s22, 0
        // Predicated region
        $region37: #{tpu_custom_call.1} parent=27 // pred_check
          %p201 = pneg %p200
        $region38: #{tpu_custom_call.1} parent=27 // pred_check_branch
          %203 = sbr.rel (%p201) target = $region40
        $region39: #{tpu_custom_call.1} parent=27 // pred_region
          %vm204 = vcmask 7168
          %205 = vst.msk [vmem:[#allocation2] sm:$0xff] %vm204, 0.0
          %206 = vst.msk [vmem:[#allocation2 + $0x8] sm:$0xff] %vm204, 0.0
        $region40: #{tpu_custom_call.1} parent=27 // pred_fallthru
          _
        %v207 = vld [vmem:[%s172] sm:$0xff]
        %v208 = vld [vmem:[%s172 + $0x8] sm:$0xff]
        %v209 = vld [vmem:[%s172 + $0x10] sm:$0xff]
        %v210 = vld [vmem:[%s172 + $0x18] sm:$0xff]
        %v211 = vld [vmem:[#allocation2] sm:$0xff]
        %v212 = vld [vmem:[#allocation2 + $0x8] sm:$0xff]
        %v213 = vadd.f32 %v207, %v208
        %214 = vadd.xlane.f32.xlu0 %v213
        %v215 = vpop.xlane.xlu0 %214
        %v216 = vadd.f32 %v209, %v210
        %217 = vadd.xlane.f32.xlu0 %v216
        %v218 = vpop.xlane.xlu0 %217
        %v219 = vadd.f32 %v211, %v215
        %v220 = vadd.f32 %v212, %v218
        %vm221 = vcmask 7168
        %222 = vst.msk [vmem:[#allocation2] sm:$0xff] %vm221, %v219
        %223 = vst.msk [vmem:[#allocation2 + $0x8] sm:$0xff] %vm221, %v220
        // Predicated region
        $region41: #{tpu_custom_call.1} parent=27 // pred_check
          %p224 = pneg %p200
        $region42: #{tpu_custom_call.1} parent=27 // pred_check_branch
          %226 = sbr.rel (%p224) target = $region44
        $region43: #{tpu_custom_call.1} parent=27 // pred_region
          %v227 = vld [vmem:[#allocation2] sm:$0xff]
          %v228 = vld [vmem:[#allocation2 + $0x8] sm:$0xff]
          %v229 = vmul.f32 %v227, 0.00390625
          %v230 = vmul.f32 %v228, 0.00390625
          %v231 = vld [vmem:[#allocation3] sm:$0xff]
          %v232 = vld [vmem:[#allocation3 + $0x8] sm:$0xff]
          %vm233 = vcmask 130048
          %v235 = vsel %vm233, %v231, 0
          %v238 = vsel %vm233, %v232, 0
          %240 = vmatpush.msra.mxu0 0.0
          %241 = vmatpush.msra.mxu0 0.0
          %242 = vmatpush.msra.mxu0 0.0
          %243 = vmatpush.msra.mxu0 0.0
          %244 = vmatpush.msra.mxu0 0.0
          %245 = vmatpush.msra.mxu0 0.0
          %246 = vmatpush.msra.mxu0 0.0
          %247 = vmatpush.msra.mxu0 0.0
          %248 = vmatpush.msra.mxu0 0.0
          %249 = vmatpush.msra.mxu0 0.0
          %250 = vmatpush.msra.mxu0 0.0
          %251 = vmatpush.msra.mxu0 0.0
          %252 = vmatpush.msra.mxu0 0.0
          %253 = vmatpush.msra.mxu0 0.0
          %254 = vmatpush.msra.mxu0 %v230
          %255 = vmatpush.msra.mxu0 %v229
          %256 = vmatmul.f32.gmra.mxu0 %v235
          %v257 = vpop.f32.mrf.mxu0
          %v258 = vadd.f32 0.0, %v257
          %259 = vmatmul.f32.gmra.mxu0 %v238
          %v260 = vpop.f32.mrf.mxu0
          %v261 = vadd.f32 0.0, %v260
          %262 = vdwg.mxu0
          %v263 = vxor.u32 %v258, 2147483648
          %v264 = vxor.u32 %v261, 2147483648
          %v265 = vmul.f32 %v263, 1.442695
          %v266 = vpow.pop %v265
          %v267 = vmul.f32 %v264, 1.442695
          %v268 = vpow.pop %v267
          %v269 = vadd.f32 %v266, 1.0
          %v270 = vadd.f32 %v268, 1.0
          %v271 = vrcp.pop %v269
          %v272 = vmul.f32 %v269, %v271
          %v273 = vsub.f32 1.0, %v272
          %v274 = vmul.f32 %v271, %v273
          %v275 = vadd.f32 %v271, %v274
          %vm276 = vweird.f32 %v269
          %vm277 = vweird.f32 %v271
          %vm278 = vmor %vm276, %vm277
          %v279 = vsel %vm278, %v271, %v275
          %v280 = vand.u32 2147483647, %v269
          %vm281 = vcmp.eq.f32.partialorder %v280, 8.507059e+37
          %v282 = vand.u32 %v269, 2147483648
          %v283 = vor.u32 1.1754944e-38, %v282
          %v284 = vsel %vm281, %v283, %v279
          %v285 = vmul.f32 1.0, %v284
          %v286 = vrcp.pop %v270
          %v287 = vmul.f32 %v270, %v286
          %v288 = vsub.f32 1.0, %v287
          %v289 = vmul.f32 %v286, %v288
          %v290 = vadd.f32 %v286, %v289
          %vm291 = vweird.f32 %v270
          %vm292 = vweird.f32 %v286
          %vm293 = vmor %vm291, %vm292
          %v294 = vsel %vm293, %v286, %v290
          %v295 = vand.u32 2147483647, %v270
          %vm296 = vcmp.eq.f32.partialorder %v295, 8.507059e+37
          %v297 = vand.u32 %v270, 2147483648
          %v298 = vor.u32 1.1754944e-38, %v297
          %v299 = vsel %vm296, %v298, %v294
          %v300 = vmul.f32 1.0, %v299
          %301 = vst.msk [vmem:[%s199] sm:$0xff] %vm221, %v285
          %302 = vst.msk [vmem:[%s199 + $0x8] sm:$0xff] %vm221, %v300
        $region44: #{tpu_custom_call.1} parent=27 // pred_fallthru
          _
        %p303 = scmp.lt.s32.totalorder %s21, 1
        %s304 = scalar_select %p303, %s21, 1
        %s305 = smul.addr %s304, 2
        %s306 = smul.addr %s305, 8
        %s307 = scalar_lea.vmem %s2, %s306
        // Predicated region
        $region45: #{tpu_custom_call.1} parent=27 // pred_check
          %p308 = pneg %p96
        $region46: #{tpu_custom_call.1} parent=27 // pred_check_branch
          %310 = sbr.rel (%p308) target = $region48
        $region47: #{tpu_custom_call.1} parent=27 // pred_region
          _
        $region48: #{tpu_custom_call.1} parent=27 // pred_fallthru
          _
      $region28: #{tpu_custom_call.1} parent=5 // pred_fallthru
        _
      %p311 = scmp.le.s32.totalorder 2, %s12
      // Predicated region
      $region49: #{tpu_custom_call.1} parent=5 // pred_check
        %p312 = pneg %p311
      $region50: #{tpu_custom_call.1} parent=5 // pred_check_branch
        %314 = sbr.rel (%p312) target = $region52
      $region51: #{tpu_custom_call.1} parent=5 // pred_region
        %s315 = ssub.s32 %s12, 2
        // Predicated region
        $region53: #{tpu_custom_call.1} parent=51 // pred_check
          %p316 = pneg %p102
        $region54: #{tpu_custom_call.1} parent=51 // pred_check_branch
          %318 = sbr.rel (%p316) target = $region56
        $region55: #{tpu_custom_call.1} parent=51 // pred_region
          %p319 = scmp.lt.s32.totalorder %s23, 1
          %s320 = scalar_select %p319, %s23, 1
          %s321 = smul.addr %s320, 2
          %s322 = smul.addr %s321, 8
          %s323 = scalar_lea.vmem %s2, %s322
        $region56: #{tpu_custom_call.1} parent=51 // pred_fallthru
          _
      $region52: #{tpu_custom_call.1} parent=5 // pred_fallthru
        _
    $region6: #{tpu_custom_call.1} parent=1 // loop_footer
      %s16 = sadd.s32 1, %s12
    $region7: #{tpu_custom_call.1} parent=1 // loop_footer_branch
      %11 = sbr.rel target = $region3
    $region8: #{tpu_custom_call.1} parent=1 // loop_exit
      _
    %324 = vsyncpa [#allocation4], 1
    %s325 = scalar_lea.sflag [#allocation4], 1
    %326 = vsyncpa %s325, 1
    %327 = vsyncpa [#allocation6], 1
    %s328 = scalar_lea.sflag [#allocation6], 1
    %329 = vsyncpa %s328, 1

</llo_original>
